<compile_context>
chip_gen: v7x
topology: tpu7x:2x2x1
jax: 0.10.0
libtpu: 0.0.40
codegen_flags: <defaults>
</compile_context>

<pallas_src>
import functools

import jax
import jax.numpy as jnp
from jax.experimental import pallas as pl
from jax.experimental.pallas import tpu as pltpu

SMOOTH = 1.0


def _primary_loss_kernel(x_ref, t_ref, out_ref, acc_ref, *, hw, block_rows, needs_mask):
    """Per-tile partials for CE + Dice.

    x_ref, t_ref : (C, rb, 128) logits / target tile (batch dim squeezed).
    out_ref      : (1, 3, 128) per-batch lane partials [ce_sum, intersection, t_sum].
    acc_ref      : (3, rb, 128) VMEM vector accumulator (persists across the inner
                   spatial grid axis; no per-step cross-lane reductions).
    """
    j = pl.program_id(1)

    @pl.when(j == 0)
    def _():
        acc_ref[...] = jnp.zeros_like(acc_ref)

    x = x_ref[...].astype(jnp.float32)                               # (C, rb, 128)
    t = t_ref[...].astype(jnp.float32)                               # (C, rb, 128)
    C = x.shape[0]

    # --- CrossEntropyLoss(input, argmax(target, dim=channel)) ---------------
    # First-index argmax over the (leading, unrolled) channel axis: pure VPU.
    ch = jax.lax.broadcasted_iota(jnp.int32, x.shape, 0)             # (C, rb, 128)
    t_max = jnp.max(t, axis=0, keepdims=True)                        # (1, rb, 128)
    arg = jnp.min(jnp.where(t == t_max, ch, jnp.int32(C)),
                  axis=0, keepdims=True)                             # (1, rb, 128)
    onehot = (ch == arg).astype(jnp.float32)                         # (C, rb, 128)

    x_max = jnp.max(x, axis=0)                                       # (rb, 128)
    e = jnp.exp(x - x_max[None])                                     # (C, rb, 128)
    sum_e = jnp.sum(e, axis=0)                                       # (rb, 128)
    lse = x_max + jnp.log(sum_e)                                     # (rb, 128)
    sel = jnp.sum(onehot * x, axis=0)                                # (rb, 128)
    ce_pix = lse - sel                                               # (rb, 128)

    # --- Dice partials (softmax never materialized) --------------------------
    # sum_c softmax(x)_c * t_c == (sum_c e_c * t_c) / sum_c e_c
    inter_pix = jnp.sum(e * t, axis=0) / sum_e                       # (rb, 128)
    t_pix = jnp.sum(t, axis=0)                                       # (rb, 128)

    if needs_mask:
        # Spatial axis was zero-padded to a whole number of blocks. Target pads
        # are exactly zero, so inter_pix / t_pix are already exact; only the CE
        # term needs masking out on the pad pixels.
        r = jax.lax.broadcasted_iota(jnp.int32, (block_rows, 128), 0)
        lane = jax.lax.broadcasted_iota(jnp.int32, (block_rows, 128), 1)
        pix = (j * block_rows + r) * 128 + lane
        ce_pix = jnp.where(pix < hw, ce_pix, 0.0)

    acc_ref[0] += ce_pix
    acc_ref[1] += inter_pix
    acc_ref[2] += t_pix

    @pl.when(j == pl.num_programs(1) - 1)
    def _():
        # Single cross-sublane reduction per batch element; lanes stay dense.
        out_ref[...] = jnp.sum(acc_ref[...], axis=1)[None]           # (1, 3, 128)


def _choose_block_rows(rows, c, itemsize, target_block_bytes):
    """Biggest multiple-of-8 row block within the per-input-block VMEM budget."""
    bytes_per_row = c * 128 * itemsize
    max_rows = max(8, (target_block_bytes // bytes_per_row) // 8 * 8)
    rows_up8 = -(-rows // 8) * 8
    return min(rows_up8, max_rows)


def primary_loss(logits, target, *, target_block_bytes=4 << 20):
    """logits, target: (N, C, H, W) float arrays. Returns scalar float32 loss."""
    N, C, H, W = logits.shape
    assert target.shape == logits.shape
    HW = H * W

    rows = pl.cdiv(HW, 128)
    itemsize = max(jnp.dtype(logits.dtype).itemsize, jnp.dtype(target.dtype).itemsize)
    rb = _choose_block_rows(rows, C, itemsize, target_block_bytes)
    n_blocks = pl.cdiv(rows, rb)
    rows_pad = n_blocks * rb
    hw_pad = rows_pad * 128
    needs_mask = hw_pad != HW

    # Free reshape (no transpose). Pad the flattened spatial axis only if needed.
    x = logits.reshape(N, C, HW)
    t = target.reshape(N, C, HW)
    if needs_mask:
        pad = hw_pad - HW
        x = jnp.pad(x, ((0, 0), (0, 0), (0, pad)))
        t = jnp.pad(t, ((0, 0), (0, 0), (0, pad)))
    x4 = x.reshape(N, C, rows_pad, 128)
    t4 = t.reshape(N, C, rows_pad, 128)

    kernel = functools.partial(
        _primary_loss_kernel, hw=HW, block_rows=rb, needs_mask=needs_mask
    )

    in_spec = pl.BlockSpec((pl.Squeezed(), C, rb, 128), lambda n, j: (n, 0, j, 0))
    partials = pl.pallas_call(
        kernel,
        out_shape=jax.ShapeDtypeStruct((N, 3, 128), jnp.float32),
        grid_spec=pltpu.PrefetchScalarGridSpec(
            num_scalar_prefetch=0,
            grid=(N, n_blocks),
            in_specs=[in_spec, in_spec],
            out_specs=pl.BlockSpec((1, 3, 128), lambda n, j: (n, 0, 0)),
            scratch_shapes=[pltpu.VMEM((3, rb, 128), jnp.float32)],
        ),
        compiler_params=pltpu.CompilerParams(
            dimension_semantics=("parallel", "arbitrary"),
        ),
    )(x4, t4)

    # Tiny final reduction in plain JAX (tree reduction, better accuracy than a
    # serial in-kernel scalar accumulator).
    ce_sum = jnp.sum(partials[:, 0])
    inter = jnp.sum(partials[:, 1])
    t_sum = jnp.sum(partials[:, 2])
    m = jnp.float32(N * HW)
    ce_loss = ce_sum / m
    # sum(softmax(x)) over all valid pixels == N*H*W exactly (softmax sums to 1).
    dice_loss = 1.0 - (2.0 * inter + SMOOTH) / (m + t_sum + SMOOTH)
    return ce_loss + dice_loss


def primary_loss_reference(logits, target):
    """Pure-JAX reference matching the PyTorch module."""
    lbl = jnp.argmax(target, axis=1)                                   # (N, H, W)
    lse = jax.scipy.special.logsumexp(logits, axis=1)                  # (N, H, W)
    sel = jnp.take_along_axis(logits, lbl[:, None], axis=1)[:, 0]      # (N, H, W)
    ce = jnp.mean(lse - sel)
    p = jax.nn.softmax(logits, axis=1)
    inter = jnp.sum(p * target)
    dice = 1.0 - (2.0 * inter + SMOOTH) / (jnp.sum(p) + jnp.sum(target) + SMOOTH)
    return ce + dice


def _make_inputs(key, n, c, h, w):
    k1, k2 = jax.random.split(key)
    logits = jax.random.normal(k1, (n, c, h, w), dtype=jnp.float32)
    labels = jax.random.randint(k2, (n, h, w), 0, c)
    target = jnp.transpose(
        jax.nn.one_hot(labels, c, dtype=jnp.float32), (0, 3, 1, 2)
    )  # (N, C, H, W) one-hot target, as the module expects
    return logits, target


if __name__ == "__main__":
    key = jax.random.PRNGKey(0)
    k_a, k_b = jax.random.split(key)

    # Case 1: canonical small shape.
    logits, target = _make_inputs(k_a, 2, 4, 16, 16)
    loss = primary_loss(logits, target)
    jax.block_until_ready(loss)
    ref = primary_loss_reference(logits, target)
    assert jnp.allclose(loss, ref, rtol=1e-5, atol=1e-5), (loss, ref)

    # Case 2: ragged spatial size (H*W not a multiple of 128) exercises pad+mask.
    logits2, target2 = _make_inputs(k_b, 1, 3, 9, 9)
    loss2 = primary_loss(logits2, target2)
    jax.block_until_ready(loss2)
    ref2 = primary_loss_reference(logits2, target2)
    assert jnp.allclose(loss2, ref2, rtol=1e-5, atol=1e-5), (loss2, ref2)

    print("KERNEL_OK")
</pallas_src>

<mosaic_0001>
module attributes {stable_mosaic.version = 11 : i64} {
  func.func @_primary_loss_kernel(%arg0: i32, %arg1: i32, %arg2: memref<1x4x8x128xf32, #tpu.memory_space<vmem>>, %arg3: memref<1x4x8x128xf32, #tpu.memory_space<vmem>>, %arg4: memref<1x3x128xf32, #tpu.memory_space<vmem>>, %arg5: memref<3x8x128xf32, #tpu.memory_space<vmem>>) attributes {dimension_semantics = [#tpu.dimension_semantics<parallel>, #tpu.dimension_semantics<arbitrary>], iteration_bounds = array<i64: 2, 1>, scalar_prefetch = 0 : i64, scratch_operands = 1 : i64, tpu.core_type = #tpu.core_type<tc>, window_params = [{transform_indices = @transform_0, window_bounds = array<i64: 1, 4, 8, 128>}, {transform_indices = @transform_1, window_bounds = array<i64: 1, 4, 8, 128>}, {transform_indices = @transform_2, window_bounds = array<i64: 1, 3, 128>}]} {
    %c0_i32 = arith.constant 0 : i32
    %0 = arith.cmpi eq, %arg1, %c0_i32 : i32
    %1 = arith.extui %0 : i1 to i32
    %c0_i32_0 = arith.constant 0 : i32
    %2 = arith.cmpi ne, %1, %c0_i32_0 : i32
    scf.if %2 {
      %cst_33 = arith.constant 0.000000e+00 : f32
      %68 = vector.broadcast %cst_33 : f32 to vector<3x8x128xf32>
      %c0_34 = arith.constant 0 : index
      %c0_35 = arith.constant 0 : index
      %c0_36 = arith.constant 0 : index
      %69 = vector.load %arg5[%c0_34, %c0_35, %c0_36] : memref<3x8x128xf32, #tpu.memory_space<vmem>>, vector<3x8x128xf32>
      tpu.vector_store %arg5[%c0_34, %c0_35, %c0_36], %68 {strides = array<i32>} : memref<3x8x128xf32, #tpu.memory_space<vmem>>, vector<3x8x128xf32>,
    } else {
    }
    %c0 = arith.constant 0 : index
    %c0_1 = arith.constant 0 : index
    %c0_2 = arith.constant 0 : index
    %c0_3 = arith.constant 0 : index
    %3 = vector.load %arg2[%c0, %c0_1, %c0_2, %c0_3] : memref<1x4x8x128xf32, #tpu.memory_space<vmem>>, vector<1x4x8x128xf32>
    %4 = vector.shape_cast %3 : vector<1x4x8x128xf32> to vector<4x8x128xf32>
    %c0_4 = arith.constant 0 : index
    %c0_5 = arith.constant 0 : index
    %c0_6 = arith.constant 0 : index
    %c0_7 = arith.constant 0 : index
    %5 = vector.load %arg3[%c0_4, %c0_5, %c0_6, %c0_7] : memref<1x4x8x128xf32, #tpu.memory_space<vmem>>, vector<1x4x8x128xf32>
    %6 = vector.shape_cast %5 : vector<1x4x8x128xf32> to vector<4x8x128xf32>
    %7 = tpu.iota {dimensions = array<i32: 0>} : vector<4x8x128xi32>
    %cst = arith.constant dense<0xFF800000> : vector<8x128xf32>
    %8 = vector.multi_reduction <maximumf>, %6, %cst [0] : vector<4x8x128xf32> to vector<8x128xf32>
    %9 = vector.shape_cast %8 : vector<8x128xf32> to vector<1x8x128xf32>
    %10 = vector.broadcast %9 : vector<1x8x128xf32> to vector<4x8x128xf32>
    %11 = arith.cmpf oeq, %6, %10 : vector<4x8x128xf32>
    %c4_i32 = arith.constant 4 : i32
    %12 = vector.broadcast %c4_i32 : i32 to vector<4x8x128xi32>
    %13 = arith.select %11, %7, %12 : vector<4x8x128xi1>, vector<4x8x128xi32>
    %cst_8 = arith.constant dense<2147483647> : vector<8x128xi32>
    %14 = vector.multi_reduction <minsi>, %13, %cst_8 [0] : vector<4x8x128xi32> to vector<8x128xi32>
    %15 = vector.shape_cast %14 : vector<8x128xi32> to vector<1x8x128xi32>
    %16 = vector.broadcast %15 : vector<1x8x128xi32> to vector<4x8x128xi32>
    %17 = arith.cmpi eq, %7, %16 : vector<4x8x128xi32>
    %18 = arith.extui %17 : vector<4x8x128xi1> to vector<4x8x128xi32>
    %19 = arith.sitofp %18 : vector<4x8x128xi32> to vector<4x8x128xf32>
    %cst_9 = arith.constant dense<0xFF800000> : vector<8x128xf32>
    %20 = vector.multi_reduction <maximumf>, %4, %cst_9 [0] : vector<4x8x128xf32> to vector<8x128xf32>
    %21 = vector.shape_cast %20 : vector<8x128xf32> to vector<1x8x128xf32>
    %22 = vector.broadcast %21 : vector<1x8x128xf32> to vector<4x8x128xf32>
    %23 = arith.subf %4, %22 : vector<4x8x128xf32>
    %24 = math.exp %23 : vector<4x8x128xf32>
    %cst_10 = arith.constant dense<0.000000e+00> : vector<8x128xf32>
    %25 = vector.multi_reduction <add>, %24, %cst_10 [0] : vector<4x8x128xf32> to vector<8x128xf32>
    %26 = math.log %25 : vector<8x128xf32>
    %27 = arith.addf %20, %26 : vector<8x128xf32>
    %28 = arith.mulf %19, %4 : vector<4x8x128xf32>
    %cst_11 = arith.constant dense<0.000000e+00> : vector<8x128xf32>
    %29 = vector.multi_reduction <add>, %28, %cst_11 [0] : vector<4x8x128xf32> to vector<8x128xf32>
    %30 = arith.subf %27, %29 : vector<8x128xf32>
    %31 = arith.mulf %24, %6 : vector<4x8x128xf32>
    %cst_12 = arith.constant dense<0.000000e+00> : vector<8x128xf32>
    %32 = vector.multi_reduction <add>, %31, %cst_12 [0] : vector<4x8x128xf32> to vector<8x128xf32>
    %33 = arith.divf %32, %25 : vector<8x128xf32>
    %cst_13 = arith.constant dense<0.000000e+00> : vector<8x128xf32>
    %34 = vector.multi_reduction <add>, %6, %cst_13 [0] : vector<4x8x128xf32> to vector<8x128xf32>
    %35 = tpu.iota {dimensions = array<i32: 0>} : vector<8x128xi32>
    %36 = tpu.iota {dimensions = array<i32: 1>} : vector<8x128xi32>
    %c8_i32 = arith.constant 8 : i32
    %37 = arith.muli %arg1, %c8_i32 : i32
    %38 = vector.broadcast %37 : i32 to vector<8x128xi32>
    %39 = arith.addi %38, %35 : vector<8x128xi32>
    %c128_i32 = arith.constant 128 : i32
    %40 = vector.broadcast %c128_i32 : i32 to vector<8x128xi32>
    %41 = arith.muli %39, %40 : vector<8x128xi32>
    %42 = arith.addi %41, %36 : vector<8x128xi32>
    %c256_i32 = arith.constant 256 : i32
    %43 = vector.broadcast %c256_i32 : i32 to vector<8x128xi32>
    %44 = arith.cmpi slt, %42, %43 : vector<8x128xi32>
    %cst_14 = arith.constant 0.000000e+00 : f32
    %45 = vector.broadcast %cst_14 : f32 to vector<8x128xf32>
    %46 = arith.select %44, %30, %45 : vector<8x128xi1>, vector<8x128xf32>
    %c0_15 = arith.constant 0 : index
    %c0_16 = arith.constant 0 : index
    %c0_17 = arith.constant 0 : index
    %47 = vector.load %arg5[%c0_15, %c0_16, %c0_17] : memref<3x8x128xf32, #tpu.memory_space<vmem>>, vector<1x8x128xf32>
    %48 = vector.shape_cast %47 : vector<1x8x128xf32> to vector<8x128xf32>
    %49 = arith.addf %48, %46 : vector<8x128xf32>
    %c0_18 = arith.constant 0 : index
    %c0_19 = arith.constant 0 : index
    %c0_20 = arith.constant 0 : index
    %50 = vector.load %arg5[%c0_18, %c0_19, %c0_20] : memref<3x8x128xf32, #tpu.memory_space<vmem>>, vector<1x8x128xf32>
    %51 = vector.shape_cast %50 : vector<1x8x128xf32> to vector<8x128xf32>
    %52 = vector.shape_cast %49 : vector<8x128xf32> to vector<1x8x128xf32>
    tpu.vector_store %arg5[%c0_18, %c0_19, %c0_20], %52 {strides = array<i32>} : memref<3x8x128xf32, #tpu.memory_space<vmem>>, vector<1x8x128xf32>,
    %c1 = arith.constant 1 : index
    %c0_21 = arith.constant 0 : index
    %c0_22 = arith.constant 0 : index
    %53 = vector.load %arg5[%c1, %c0_21, %c0_22] : memref<3x8x128xf32, #tpu.memory_space<vmem>>, vector<1x8x128xf32>
    %54 = vector.shape_cast %53 : vector<1x8x128xf32> to vector<8x128xf32>
    %55 = arith.addf %54, %33 : vector<8x128xf32>
    %c1_23 = arith.constant 1 : index
    %c0_24 = arith.constant 0 : index
    %c0_25 = arith.constant 0 : index
    %56 = vector.load %arg5[%c1_23, %c0_24, %c0_25] : memref<3x8x128xf32, #tpu.memory_space<vmem>>, vector<1x8x128xf32>
    %57 = vector.shape_cast %56 : vector<1x8x128xf32> to vector<8x128xf32>
    %58 = vector.shape_cast %55 : vector<8x128xf32> to vector<1x8x128xf32>
    tpu.vector_store %arg5[%c1_23, %c0_24, %c0_25], %58 {strides = array<i32>} : memref<3x8x128xf32, #tpu.memory_space<vmem>>, vector<1x8x128xf32>,
    %c2 = arith.constant 2 : index
    %c0_26 = arith.constant 0 : index
    %c0_27 = arith.constant 0 : index
    %59 = vector.load %arg5[%c2, %c0_26, %c0_27] : memref<3x8x128xf32, #tpu.memory_space<vmem>>, vector<1x8x128xf32>
    %60 = vector.shape_cast %59 : vector<1x8x128xf32> to vector<8x128xf32>
    %61 = arith.addf %60, %34 : vector<8x128xf32>
    %c2_28 = arith.constant 2 : index
    %c0_29 = arith.constant 0 : index
    %c0_30 = arith.constant 0 : index
    %62 = vector.load %arg5[%c2_28, %c0_29, %c0_30] : memref<3x8x128xf32, #tpu.memory_space<vmem>>, vector<1x8x128xf32>
    %63 = vector.shape_cast %62 : vector<1x8x128xf32> to vector<8x128xf32>
    %64 = vector.shape_cast %61 : vector<8x128xf32> to vector<1x8x128xf32>
    tpu.vector_store %arg5[%c2_28, %c0_29, %c0_30], %64 {strides = array<i32>} : memref<3x8x128xf32, #tpu.memory_space<vmem>>, vector<1x8x128xf32>,
    %c0_i32_31 = arith.constant 0 : i32
    %65 = arith.cmpi eq, %arg1, %c0_i32_31 : i32
    %66 = arith.extui %65 : i1 to i32
    %c0_i32_32 = arith.constant 0 : i32
    %67 = arith.cmpi ne, %66, %c0_i32_32 : i32
    scf.if %67 {
      %c0_33 = arith.constant 0 : index
      %c0_34 = arith.constant 0 : index
      %c0_35 = arith.constant 0 : index
      %68 = vector.load %arg5[%c0_33, %c0_34, %c0_35] : memref<3x8x128xf32, #tpu.memory_space<vmem>>, vector<3x8x128xf32>
      %cst_36 = arith.constant dense<0.000000e+00> : vector<3x128xf32>
      %69 = vector.multi_reduction <add>, %68, %cst_36 [1] : vector<3x8x128xf32> to vector<3x128xf32>
      %70 = vector.shape_cast %69 : vector<3x128xf32> to vector<1x3x128xf32>
      %c0_37 = arith.constant 0 : index
      %c0_38 = arith.constant 0 : index
      %c0_39 = arith.constant 0 : index
      %71 = vector.load %arg4[%c0_37, %c0_38, %c0_39] : memref<1x3x128xf32, #tpu.memory_space<vmem>>, vector<1x3x128xf32>
      tpu.vector_store %arg4[%c0_37, %c0_38, %c0_39], %70 {strides = array<i32>} : memref<1x3x128xf32, #tpu.memory_space<vmem>>, vector<1x3x128xf32>,
    } else {
    }
    return
  }
  func.func @transform_0(%arg0: i32, %arg1: i32) -> (i32, i32, i32, i32) {
    %c0_i32 = arith.constant 0 : i32
    %c0_i32_0 = arith.constant 0 : i32
    %c0_i32_1 = arith.constant 0 : i32
    return %arg0, %c0_i32, %arg1, %c0_i32_0 : i32, i32, i32, i32
  }
  func.func @transform_1(%arg0: i32, %arg1: i32) -> (i32, i32, i32, i32) {
    %c0_i32 = arith.constant 0 : i32
    %c0_i32_0 = arith.constant 0 : i32
    %c0_i32_1 = arith.constant 0 : i32
    return %arg0, %c0_i32, %arg1, %c0_i32_0 : i32, i32, i32, i32
  }
  func.func @transform_2(%arg0: i32, %arg1: i32) -> (i32, i32, i32) {
    %c0_i32 = arith.constant 0 : i32
    %c0_i32_0 = arith.constant 0 : i32
    %c0_i32_1 = arith.constant 0 : i32
    return %arg0, %c0_i32, %c0_i32_0 : i32, i32, i32
  }
}

</mosaic_0001>

<llo_original>
// kernel: tpu_custom_call.1
$region0: #{tpu_custom_call.1}
  #allocation0 [shape = 'u32[]', space=smem, size = 0x4, offset = 0x4, fixed_abs, tag = 'smem constant byte address 0x4 - core index']
  #allocation1 [shape = 'u32[144,128]{1,0:T(1,128)}', space=vmem, size = 0x12000, scoped, tag = 'internal scratch']
  #allocation2 [shape = 'f32[3,8,128]{2,1,0:T(8,128)}', space=vmem, size = 0x3000, scoped, tag = 'scratch operand']
  %s0 = inlined_call_operand.hbm [shape: f32[2,4,8,128], index: 0, kind: input, shape index: {}]
  %s1 = inlined_call_operand.hbm [shape: f32[2,4,8,128], index: 1, kind: input, shape index: {}]
  %s2 = inlined_call_operand.vmem [shape: f32[2,3,128], index: 2, kind: output, shape index: {}]
  %s3 = sld [smem:[#allocation0]]
  $region57: #{tpu_custom_call.1} parent=0
    _
  %s5 = ssub.s32 1, %s3
  %s6 = scalar_select 0, %s5, %s3
  $region1: #{tpu_custom_call.1} parent=0
    #allocation3 [shape = 'u8[32768]{0}', space=vmem, size = 0x8000, scoped, tag = 'input window, operand 0']
    #allocation4 [shape = 's32[2]{0}', space=sflag, size = 0x8, scoped, tag = 'scoped memory for tpu_custom_call.1']
    #allocation5 [shape = 'u8[32768]{0}', space=vmem, size = 0x8000, scoped, tag = 'input window, operand 1']
    #allocation6 [shape = 's32[2]{0}', space=sflag, size = 0x8, scoped, tag = 'scoped memory for tpu_custom_call.1']
    %7 = vsyncpa [#allocation4], 0
    %s8 = scalar_lea.sflag [#allocation4], 1
    %9 = vsyncpa %s8, 0
    %10 = vsyncpa [#allocation6], 0
    %s11 = scalar_lea.sflag [#allocation6], 1
    %12 = vsyncpa %s11, 0
    loop: start=0, step=1, limit=4
    $region2: #{tpu_custom_call.1} parent=1 // loop_pre_header
      _
    $region3: #{tpu_custom_call.1} parent=1 // loop_header
      %s14 = sphi 0, %s18
      %p15 = scmp.ge.s32.totalorder %s14, 4
      %s21 = sphi 0, %s33
      %s22 = sphi 0, %s29
      %s23 = sphi 0, %s21
      %s24 = sphi 0, %s22
      %s25 = sphi 0, %s23
      %s26 = sphi 0, %s24
      %s38 = sphi 0, %s40
      %s41 = sphi 0, %s38
      %s42 = sphi 0, %s41
      %s58 = sphi 0, %s42
      %s66 = sphi 0, %s68
      %s69 = sphi 0, %s66
      %s70 = sphi 0, %s69
      %s86 = sphi 0, %s70
      %s92 = sphi 0, %s94
      %s95 = sphi 0, %s92
      %s96 = sphi 0, %s95
      %s112 = sphi 0, %s96
    $region4: #{tpu_custom_call.1} parent=1 // loop_header_branch
      %17 = sbr.rel (%p15) target = $region8
    $region5: #{tpu_custom_call.1} parent=1 // loop_body
      %s19 = ssub.s32 %s14, 1
      %s20 = ssub.s32 %s14, 2
      %s27 = sadd.s32 1, %s22
      %p28 = scmp.ge.s32.totalorder %s27, 1
      %s29 = scalar_select %p28, 0, %s27
      %s30 = sadd.s32 1, %s21
      %s31 = scalar_select %p28, %s30, %s21
      %p32 = scmp.ge.s32.totalorder %s31, 2
      %s33 = scalar_select %p32, 0, %s31
      %s34 = ssub.s32 %s21, %s33
      %s35 = ssub.s32 %s22, %s29
      %s36 = sor.u32 %s34, %s35
      %p37 = scmp.eq.s32.totalorder %s36, 0
      %s39 = sadd.s32 %s38, 1
      %s40 = scalar_select %p37, %s38, %s39
      %p43 = pneg %p37
      %p44 = scmp.eq.s32.totalorder %s14, 1
      %p45 = por %p43, %p44
      %p46 = scmp.ne.s32.totalorder %s38, %s41
      %p47 = scmp.eq.s32.totalorder %s14, 0
      %p48 = por %p46, %p47
      %p49 = scmp.ne.s32.totalorder %s38, %s41
      %p50 = scmp.eq.s32.totalorder %s19, 1
      %p51 = por %p49, %p50
      %p52 = scmp.ne.s32.totalorder %s41, %s42
      %p53 = scmp.eq.s32.totalorder %s19, 0
      %p54 = por %p52, %p53
      %p55 = scmp.ne.s32.totalorder %s41, %s42
      %p56 = scmp.eq.s32.totalorder %s20, 1
      %p57 = por %p55, %p56
      %p59 = scmp.ne.s32.totalorder %s42, %s58
      %p60 = scmp.eq.s32.totalorder %s20, 0
      %p61 = por %p59, %p60
      %s62 = ssub.s32 %s21, %s33
      %s63 = ssub.s32 %s22, %s29
      %s64 = sor.u32 %s62, %s63
      %p65 = scmp.eq.s32.totalorder %s64, 0
      %s67 = sadd.s32 %s66, 1
      %s68 = scalar_select %p65, %s66, %s67
      %p71 = pneg %p65
      %p72 = scmp.eq.s32.totalorder %s14, 1
      %p73 = por %p71, %p72
      %p74 = scmp.ne.s32.totalorder %s66, %s69
      %p75 = scmp.eq.s32.totalorder %s14, 0
      %p76 = por %p74, %p75
      %p77 = scmp.ne.s32.totalorder %s66, %s69
      %p78 = scmp.eq.s32.totalorder %s19, 1
      %p79 = por %p77, %p78
      %p80 = scmp.ne.s32.totalorder %s69, %s70
      %p81 = scmp.eq.s32.totalorder %s19, 0
      %p82 = por %p80, %p81
      %p83 = scmp.ne.s32.totalorder %s69, %s70
      %p84 = scmp.eq.s32.totalorder %s20, 1
      %p85 = por %p83, %p84
      %p87 = scmp.ne.s32.totalorder %s70, %s86
      %p88 = scmp.eq.s32.totalorder %s20, 0
      %p89 = por %p87, %p88
      %s90 = ssub.s32 %s21, %s33
      %p91 = scmp.eq.s32.totalorder %s90, 0
      %s93 = sadd.s32 %s92, 1
      %s94 = scalar_select %p91, %s92, %s93
      %p97 = pneg %p91
      %p98 = scmp.eq.s32.totalorder %s14, 1
      %p99 = por %p97, %p98
      %p100 = scmp.ne.s32.totalorder %s92, %s95
      %p101 = scmp.eq.s32.totalorder %s14, 0
      %p102 = por %p100, %p101
      %p103 = scmp.ne.s32.totalorder %s92, %s95
      %p104 = scmp.eq.s32.totalorder %s19, 1
      %p105 = por %p103, %p104
      %p106 = scmp.ne.s32.totalorder %s95, %s96
      %p107 = scmp.eq.s32.totalorder %s19, 0
      %p108 = por %p106, %p107
      %p109 = scmp.ne.s32.totalorder %s95, %s96
      %p110 = scmp.eq.s32.totalorder %s20, 1
      %p111 = por %p109, %p110
      %p113 = scmp.ne.s32.totalorder %s96, %s112
      %p114 = scmp.eq.s32.totalorder %s20, 0
      %p115 = por %p113, %p114
      %p116 = scmp.le.s32.totalorder 1, %s14
      %p117 = scmp.lt.s32.totalorder %s14, 3
      %p118 = pnand %p116, %p117
      %p119 = pneg %p118
      // Predicated region
      $region9: #{tpu_custom_call.1} parent=5 // pred_check
        _
      $region10: #{tpu_custom_call.1} parent=5 // pred_check_branch
        %121 = sbr.rel (%p118) target = $region12
      $region11: #{tpu_custom_call.1} parent=5 // pred_region
        %s122 = ssub.s32 %s14, 1
      $region12: #{tpu_custom_call.1} parent=5 // pred_fallthru
        _
      %p123 = scmp.lt.s32.totalorder %s14, 2
      // Predicated region
      $region13: #{tpu_custom_call.1} parent=5 // pred_check
        %p124 = pneg %p123
      $region14: #{tpu_custom_call.1} parent=5 // pred_check_branch
        %126 = sbr.rel (%p124) target = $region16
      $region15: #{tpu_custom_call.1} parent=5 // pred_region
        // Predicated region
        $region17: #{tpu_custom_call.1} parent=15 // pred_check
          %p127 = pneg %p48
        $region18: #{tpu_custom_call.1} parent=15 // pred_check_branch
          %129 = sbr.rel (%p127) target = $region20
        $region19: #{tpu_custom_call.1} parent=15 // pred_region
          %s130 = sand.u32 %s38, 1
          %s131 = scalar_lea.sflag [#allocation4], %s130
          %s132 = sand.u32 %s38, 1
          %s133 = smul.addr %s132, 32
          %s134 = scalar_lea.vmem [#allocation3], %s133
          %s136 = ssub.s32 512, 512
          %137 = vsyncadd %s131, %s136
          %s138 = smul.addr %s21, 4
          %s139 = sadd.s32 %s22, %s138
          %s140 = smul.addr %s139, 128
          %s141 = scalar_lea.hbm %s0, %s140
          %s142 = sshll.u32 %s134, 4
          %s143 = int_to_ptr.vmem [resolvable:$true] %s142
          %148 = dma.hbm_to_vmem [thread:$0]  %s141, 512, %s143, %s131, 128, 128, 8
        $region20: #{tpu_custom_call.1} parent=15 // pred_fallthru
          _
        // Predicated region
        $region21: #{tpu_custom_call.1} parent=15 // pred_check
          %p149 = pneg %p76
        $region22: #{tpu_custom_call.1} parent=15 // pred_check_branch
          %151 = sbr.rel (%p149) target = $region24
        $region23: #{tpu_custom_call.1} parent=15 // pred_region
          %s152 = sand.u32 %s66, 1
          %s153 = scalar_lea.sflag [#allocation6], %s152
          %s154 = sand.u32 %s66, 1
          %s155 = smul.addr %s154, 32
          %s156 = scalar_lea.vmem [#allocation5], %s155
          %s158 = ssub.s32 512, 512
          %159 = vsyncadd %s153, %s158
          %s160 = smul.addr %s21, 4
          %s161 = sadd.s32 %s22, %s160
          %s162 = smul.addr %s161, 128
          %s163 = scalar_lea.hbm %s1, %s162
          %s164 = sshll.u32 %s156, 4
          %s165 = int_to_ptr.vmem [resolvable:$true] %s164
          %170 = dma.hbm_to_vmem [thread:$0]  %s163, 512, %s165, %s153, 128, 128, 8
        $region24: #{tpu_custom_call.1} parent=15 // pred_fallthru
          _
      $region16: #{tpu_custom_call.1} parent=5 // pred_fallthru
        _
      %p171 = scmp.le.s32.totalorder 1, %s14
      %p172 = scmp.lt.s32.totalorder %s14, 3
      %p173 = pnand %p171, %p172
      %p174 = pneg %p173
      // Predicated region
      $region25: #{tpu_custom_call.1} parent=5 // pred_check
        _
      $region26: #{tpu_custom_call.1} parent=5 // pred_check_branch
        %176 = sbr.rel (%p173) target = $region28
      $region27: #{tpu_custom_call.1} parent=5 // pred_region
        %s177 = ssub.s32 %s14, 1
        %s178 = sand.u32 %s41, 1
        %s179 = scalar_lea.sflag [#allocation4], %s178
        %s180 = sand.u32 %s41, 1
        %s181 = smul.addr %s180, 32
        %s182 = scalar_lea.vmem [#allocation3], %s181
        // Predicated region
        $region29: #{tpu_custom_call.1} parent=27 // pred_check
          %p183 = pneg %p54
        $region30: #{tpu_custom_call.1} parent=27 // pred_check_branch
          %185 = sbr.rel (%p183) target = $region32
        $region31: #{tpu_custom_call.1} parent=27 // pred_region
          %186 = dma.done %s179, 512
        $region32: #{tpu_custom_call.1} parent=27 // pred_fallthru
          _
        %s187 = sand.u32 %s69, 1
        %s188 = scalar_lea.sflag [#allocation6], %s187
        %s189 = sand.u32 %s69, 1
        %s190 = smul.addr %s189, 32
        %s191 = scalar_lea.vmem [#allocation5], %s190
        // Predicated region
        $region33: #{tpu_custom_call.1} parent=27 // pred_check
          %p192 = pneg %p82
        $region34: #{tpu_custom_call.1} parent=27 // pred_check_branch
          %194 = sbr.rel (%p192) target = $region36
        $region35: #{tpu_custom_call.1} parent=27 // pred_region
          %195 = dma.done %s188, 512
        $region36: #{tpu_custom_call.1} parent=27 // pred_fallthru
          _
        %s196 = sand.u32 %s41, 1
        %s197 = scalar_lea.sflag [#allocation4], %s196
        %s198 = sand.u32 %s41, 1
        %s199 = smul.addr %s198, 32
        %s200 = scalar_lea.vmem [#allocation3], %s199
        %p201 = pneg %p54
        %p202 = pneg %p51
        %s203 = sand.u32 %s69, 1
        %s204 = scalar_lea.sflag [#allocation6], %s203
        %s205 = sand.u32 %s69, 1
        %s206 = smul.addr %s205, 32
        %s207 = scalar_lea.vmem [#allocation5], %s206
        %p208 = pneg %p82
        %p209 = pneg %p79
        %p210 = pneg %p108
        %p211 = pneg %p105
        %p212 = scmp.lt.s32.totalorder %s23, 1
        %s213 = scalar_select %p212, %s23, 1
        %s214 = smul.addr %s213, 4
        %s215 = scalar_lea.vmem %s2, %s214
        %p216 = scmp.lt.s32.totalorder %s23, 1
        %s217 = scalar_select %p216, %s23, 1
        %s218 = smul.addr %s217, 4
        %s219 = scalar_lea.vmem %s2, %s218
        %p220 = scmp.eq.s32.totalorder %s24, 0
        // Predicated region
        $region37: #{tpu_custom_call.1} parent=27 // pred_check
          %p221 = pneg %p220
        $region38: #{tpu_custom_call.1} parent=27 // pred_check_branch
          %223 = sbr.rel (%p221) target = $region40
        $region39: #{tpu_custom_call.1} parent=27 // pred_region
          %224 = vst [vmem:[#allocation2] sm:$0xff] 0.0
          %225 = vst [vmem:[#allocation2 + $0x8] sm:$0xff] 0.0
          %226 = vst [vmem:[#allocation2 + $0x10] sm:$0xff] 0.0
        $region40: #{tpu_custom_call.1} parent=27 // pred_fallthru
          _
        %v227 = vld [vmem:[%s182] sm:$0xff]
        %v228 = vld [vmem:[%s182 + $0x8] sm:$0xff]
        %v229 = vld [vmem:[%s182 + $0x10] sm:$0xff]
        %v230 = vld [vmem:[%s182 + $0x18] sm:$0xff]
        %v231 = vld [vmem:[%s191] sm:$0xff]
        %v232 = vld [vmem:[%s191 + $0x8] sm:$0xff]
        %v233 = vld [vmem:[%s191 + $0x10] sm:$0xff]
        %v234 = vld [vmem:[%s191 + $0x18] sm:$0xff]
        %v235 = vmax.f32 %v231, %v232
        %v236 = vmax.f32 %v233, %v234
        %v237 = vmax.f32 %v235, %v236
        %vm238 = vcmp.eq.f32.partialorder %v231, %v237
        %vm239 = vcmp.eq.f32.partialorder %v232, %v237
        %vm240 = vcmp.eq.f32.partialorder %v233, %v237
        %vm241 = vcmp.eq.f32.partialorder %v234, %v237
        %v242 = vsel %vm238, 0, 4
        %v243 = vsel %vm239, 1, 4
        %v244 = vsel %vm240, 2, 4
        %v245 = vsel %vm241, 3, 4
        %vm246 = vcmp.lt.s32.totalorder %v242, %v243
        %v247 = vsel %vm246, %v242, %v243
        %vm248 = vcmp.lt.s32.totalorder %v244, %v245
        %v249 = vsel %vm248, %v244, %v245
        %vm250 = vcmp.lt.s32.totalorder %v247, %v249
        %v251 = vsel %vm250, %v247, %v249
        %vm252 = vcmp.eq.s32.totalorder %v251, 0
        %vm253 = vcmp.eq.s32.totalorder %v251, 1
        %vm254 = vcmp.eq.s32.totalorder %v251, 2
        %vm255 = vcmp.eq.s32.totalorder %v251, 3
        %v256 = vsel %vm252, 1, 0
        %v257 = vsel %vm253, 1, 0
        %v258 = vsel %vm254, 1, 0
        %v259 = vsel %vm255, 1, 0
        %v260 = vcvt.s32.f32 %v256
        %v261 = vcvt.s32.f32 %v257
        %v262 = vcvt.s32.f32 %v258
        %v263 = vcvt.s32.f32 %v259
        %v264 = vmax.f32 %v227, %v228
        %v265 = vmax.f32 %v229, %v230
        %v266 = vmax.f32 %v264, %v265
        %v267 = vsub.f32 %v227, %v266
        %v268 = vsub.f32 %v228, %v266
        %v269 = vsub.f32 %v229, %v266
        %v270 = vsub.f32 %v230, %v266
        %v271 = vmul.f32 %v267, 1.442695
        %v272 = vpow.pop %v271
        %v273 = vmul.f32 %v268, 1.442695
        %v274 = vpow.pop %v273
        %v275 = vmul.f32 %v269, 1.442695
        %v276 = vpow.pop %v275
        %v277 = vmul.f32 %v270, 1.442695
        %v278 = vpow.pop %v277
        %v279 = vadd.f32 %v272, %v274
        %v280 = vadd.f32 %v279, %v276
        %v281 = vadd.f32 %v280, %v278
        %v282 = vlog2.pop %v281
        %v283 = vmul.f32 %v282, 0.6931472
        %v284 = vadd.f32 %v266, %v283
        %v285 = vmul.f32 %v260, %v227
        %v286 = vmul.f32 %v261, %v228
        %v287 = vmul.f32 %v262, %v229
        %v288 = vmul.f32 %v263, %v230
        %v289 = vadd.f32 %v285, %v286
        %v290 = vadd.f32 %v289, %v287
        %v291 = vadd.f32 %v290, %v288
        %v292 = vsub.f32 %v284, %v291
        %v293 = vmul.f32 %v272, %v231
        %v294 = vmul.f32 %v274, %v232
        %v295 = vmul.f32 %v276, %v233
        %v296 = vmul.f32 %v278, %v234
        %v297 = vadd.f32 %v293, %v294
        %v298 = vadd.f32 %v297, %v295
        %v299 = vadd.f32 %v298, %v296
        %v300 = vrcp.pop %v281
        %v301 = vmul.f32 %v299, %v300
        %v302 = vadd.f32 %v231, %v232
        %v303 = vadd.f32 %v302, %v233
        %v304 = vadd.f32 %v303, %v234
        %v305 = vlaneseq
        %v306 = vshrl.u32 %v305, 7
        %v307 = vlaneseq
        %v308 = vand.u32 %v307, 127
        %s309 = smul.u32 %s24, 8
        %v310 = vstv %s309
        %v311 = vadd.s32 %v310, %v306
        %v312 = vmul.u32 %v311, 128
        %v313 = vadd.s32 %v312, %v308
        %vm314 = vcmp.lt.s32.totalorder %v313, 256
        %v315 = vsel %vm314, %v292, 0.0
        %v316 = vld [vmem:[#allocation2] sm:$0xff]
        %v317 = vadd.f32 %v316, %v315
        %318 = vst [vmem:[#allocation2] sm:$0xff] %v317
        %s319 = scalar_lea.vmem [#allocation2], 8
        %v320 = vld [vmem:[%s319] sm:$0xff]
        %v321 = vadd.f32 %v320, %v301
        %322 = vst [vmem:[%s319] sm:$0xff] %v321
        %s323 = scalar_lea.vmem [#allocation2], 16
        %v324 = vld [vmem:[%s323] sm:$0xff]
        %v325 = vadd.f32 %v324, %v304
        %326 = vst [vmem:[%s323] sm:$0xff] %v325
        // Predicated region
        $region41: #{tpu_custom_call.1} parent=27 // pred_check
          %p327 = pneg %p220
        $region42: #{tpu_custom_call.1} parent=27 // pred_check_branch
          %329 = sbr.rel (%p327) target = $region44
        $region43: #{tpu_custom_call.1} parent=27 // pred_region
          %v330 = vld [vmem:[#allocation2] sm:$0xff]
          %v331 = vld [vmem:[#allocation2 + $0x8] sm:$0xff]
          %v332 = vld [vmem:[#allocation2 + $0x10] sm:$0xff]
          %v333 = vrot.slane %v330, 4
          %v334 = vadd.f32 %v330, %v333
          %v335 = vrot.slane %v334, 2
          %v336 = vadd.f32 %v334, %v335
          %v337 = vrot.slane %v336, 1
          %v338 = vadd.f32 %v336, %v337
          %v339 = vrot.slane %v331, 4
          %v340 = vadd.f32 %v331, %v339
          %v341 = vrot.slane %v340, 2
          %v342 = vadd.f32 %v340, %v341
          %v343 = vrot.slane %v342, 1
          %v344 = vadd.f32 %v342, %v343
          %v345 = vrot.slane %v332, 4
          %v346 = vadd.f32 %v332, %v345
          %v347 = vrot.slane %v346, 2
          %v348 = vadd.f32 %v346, %v347
          %v349 = vrot.slane %v348, 1
          %v350 = vadd.f32 %v348, %v349
          %vm354 = vcmask 1041409
          %v355 = vsel %vm354, %v344, %v338
          %vm356 = vcmask 1042434
          %v357 = vsel %vm356, %v350, %v355
          %359 = vst [vmem:[%s219] sm:$0x7] %v357
        $region44: #{tpu_custom_call.1} parent=27 // pred_fallthru
          _
        %p360 = scmp.lt.s32.totalorder %s23, 1
        %s361 = scalar_select %p360, %s23, 1
        %s362 = smul.addr %s361, 4
        %s363 = scalar_lea.vmem %s2, %s362
        // Predicated region
        $region45: #{tpu_custom_call.1} parent=27 // pred_check
          %p364 = pneg %p105
        $region46: #{tpu_custom_call.1} parent=27 // pred_check_branch
          %366 = sbr.rel (%p364) target = $region48
        $region47: #{tpu_custom_call.1} parent=27 // pred_region
          _
        $region48: #{tpu_custom_call.1} parent=27 // pred_fallthru
          _
      $region28: #{tpu_custom_call.1} parent=5 // pred_fallthru
        _
      %p367 = scmp.le.s32.totalorder 2, %s14
      // Predicated region
      $region49: #{tpu_custom_call.1} parent=5 // pred_check
        %p368 = pneg %p367
      $region50: #{tpu_custom_call.1} parent=5 // pred_check_branch
        %370 = sbr.rel (%p368) target = $region52
      $region51: #{tpu_custom_call.1} parent=5 // pred_region
        %s371 = ssub.s32 %s14, 2
        // Predicated region
        $region53: #{tpu_custom_call.1} parent=51 // pred_check
          %p372 = pneg %p111
        $region54: #{tpu_custom_call.1} parent=51 // pred_check_branch
          %374 = sbr.rel (%p372) target = $region56
        $region55: #{tpu_custom_call.1} parent=51 // pred_region
          %p375 = scmp.lt.s32.totalorder %s25, 1
          %s376 = scalar_select %p375, %s25, 1
          %s377 = smul.addr %s376, 4
          %s378 = scalar_lea.vmem %s2, %s377
        $region56: #{tpu_custom_call.1} parent=51 // pred_fallthru
          _
      $region52: #{tpu_custom_call.1} parent=5 // pred_fallthru
        _
    $region6: #{tpu_custom_call.1} parent=1 // loop_footer
      %s18 = sadd.s32 1, %s14
    $region7: #{tpu_custom_call.1} parent=1 // loop_footer_branch
      %13 = sbr.rel target = $region3
    $region8: #{tpu_custom_call.1} parent=1 // loop_exit
      _
    %379 = vsyncpa [#allocation4], 1
    %s380 = scalar_lea.sflag [#allocation4], 1
    %381 = vsyncpa %s380, 1
    %382 = vsyncpa [#allocation6], 1
    %s383 = scalar_lea.sflag [#allocation6], 1
    %384 = vsyncpa %s383, 1

</llo_original>
